<compile_context>
chip_gen: v5e
topology: v5e:2x2
jax: 0.10.0
libtpu: 0.0.40
codegen_flags: <defaults>
</compile_context>

<pallas_src>
import functools

import jax
import jax.numpy as jnp
from jax.experimental import pallas as pl
from jax.experimental.pallas import tpu as pltpu


def _wce_kernel(binary_ref, heads_ref, tgt_ref, o_ref, *, batch, tile_b):
    """One batch tile: emit per-tile partial sums.

    binary_ref : (2, TB) f32         binary-head logits (classes on sublanes)
    heads_ref  : (4, C, TB) f32      stacked [y11, y12, y21, y22] logits
    tgt_ref    : (5, TB) f32         target rows: [bin, l1, l2, l3, l4]
    o_ref      : (8, 128) f32        partials in sublane 0, lanes 0..6:
                                     [sum_ce_bin, s11, s12, s21, s22, n_pos, n_neg]
    """
    TB = tile_b

    def head_ce(x, label):
        # x: (C, TB) f32 logits, label: (1, TB) int32 -> per-sample NLL (1, TB)
        m = jnp.max(x, axis=0, keepdims=True)                      # sublane reduce
        z = x - m
        se = jnp.sum(jnp.exp(z), axis=0, keepdims=True)            # (1, TB)
        sub = jax.lax.broadcasted_iota(jnp.int32, z.shape, 0)
        picked = jnp.sum(jnp.where(sub == label, z, 0.0),
                         axis=0, keepdims=True)                    # (1, TB)
        return jnp.log(se) - picked

    # Labels: float-truncated like torch's .long()
    t0 = tgt_ref[0:1, :]                                           # (1, TB) f32
    lab0 = t0.astype(jnp.int32)
    lab1 = tgt_ref[1:2, :].astype(jnp.int32)
    lab2 = tgt_ref[2:3, :].astype(jnp.int32)
    lab3 = tgt_ref[3:4, :].astype(jnp.int32)
    lab4 = tgt_ref[4:5, :].astype(jnp.int32)

    ce_bin = head_ce(binary_ref[...], lab0)                        # (1, TB)
    ce11 = head_ce(heads_ref[0], lab1)
    ce12 = head_ce(heads_ref[1], lab2)
    ce21 = head_ce(heads_ref[2], lab3)
    ce22 = head_ce(heads_ref[3], lab4)

    # Mask out padded lanes (batch padded up to a multiple of the tile).
    gidx = (pl.program_id(0) * TB
            + jax.lax.broadcasted_iota(jnp.int32, (1, TB), 1))
    valid = (gidx < batch).astype(jnp.float32)
    # NOTE: 0.5 lands in BOTH masks (>= and <=), matching the PyTorch module.
    pos = jnp.where(t0 >= 0.5, valid, 0.0)
    neg = jnp.where(t0 <= 0.5, valid, 0.0)

    s_bin = jnp.sum(valid * ce_bin)
    s11 = jnp.sum(neg * ce11)
    s12 = jnp.sum(neg * ce12)
    s21 = jnp.sum(pos * ce21)
    s22 = jnp.sum(pos * ce22)
    n_pos = jnp.sum(pos)
    n_neg = jnp.sum(neg)

    sub = jax.lax.broadcasted_iota(jnp.int32, (8, 128), 0)
    lane = jax.lax.broadcasted_iota(jnp.int32, (8, 128), 1)
    flat = sub * 128 + lane
    out = jnp.where(flat == 0, s_bin, 0.0)
    out = out + jnp.where(flat == 1, s11, 0.0)
    out = out + jnp.where(flat == 2, s12, 0.0)
    out = out + jnp.where(flat == 3, s21, 0.0)
    out = out + jnp.where(flat == 4, s22, 0.0)
    out = out + jnp.where(flat == 5, n_pos, 0.0)
    out = out + jnp.where(flat == 6, n_neg, 0.0)
    o_ref[...] = out


@functools.partial(jax.jit, static_argnames=("max_tile_b",))
def weighted_cross_entropy(binary, y11, y12, y21, y22, target, loss_weights,
                           max_tile_b=4096):
    B = binary.shape[0]
    C = y11.shape[1]

    # Lane-dense batch tile: multiple of 128, capped (VMEM use is tiny anyway).
    tile_b = min(max_tile_b, ((B + 127) // 128) * 128)
    num_tiles = (B + tile_b - 1) // tile_b
    b_pad = num_tiles * tile_b

    # Layout plumbing: batch -> lane axis; stack aux heads into one input.
    binary_t = jnp.transpose(binary).astype(jnp.float32)                # (2, B)
    heads_t = jnp.stack([y11.T, y12.T, y21.T, y22.T]).astype(jnp.float32)  # (4, C, B)
    tgt_t = jnp.transpose(target).astype(jnp.float32)                   # (5, B)

    pad = b_pad - B
    if pad:
        binary_t = jnp.pad(binary_t, ((0, 0), (0, pad)))
        heads_t = jnp.pad(heads_t, ((0, 0), (0, 0), (0, pad)))
        tgt_t = jnp.pad(tgt_t, ((0, 0), (0, pad)))

    kernel = functools.partial(_wce_kernel, batch=B, tile_b=tile_b)
    partials = pl.pallas_call(
        kernel,
        out_shape=jax.ShapeDtypeStruct((num_tiles * 8, 128), jnp.float32),
        grid_spec=pltpu.PrefetchScalarGridSpec(
            num_scalar_prefetch=0,
            grid=(num_tiles,),
            in_specs=[
                pl.BlockSpec((2, tile_b), lambda i: (0, i)),
                pl.BlockSpec((4, C, tile_b), lambda i: (0, 0, i)),
                pl.BlockSpec((5, tile_b), lambda i: (0, i)),
            ],
            out_specs=pl.BlockSpec((8, 128), lambda i: (i, 0)),
        ),
        compiler_params=pltpu.CompilerParams(
            dimension_semantics=("parallel",),
            vmem_limit_bytes=32 * 1024 * 1024,
        ),
    )(binary_t, heads_t, tgt_t)

    # Reduce per-tile partials and apply weights / guarded divides (cheap scalars).
    tot = jnp.sum(partials, axis=0)                                     # (128,)
    s_bin, s11, s12, s21, s22 = tot[0], tot[1], tot[2], tot[3], tot[4]
    n_pos, n_neg = tot[5], tot[6]

    w = loss_weights.astype(jnp.float32)
    loss = w[0] * s_bin / B                                             # mean CE, binary head
    pos_term = w[1] * s21 + w[2] * s22
    neg_term = w[1] * s11 + w[2] * s12
    loss = loss + jnp.where(n_pos > 0.0,
                            pos_term / jnp.maximum(n_pos, 1.0), 0.0)
    loss = loss + jnp.where(n_neg > 0.0,
                            neg_term / jnp.maximum(n_neg, 1.0), 0.0)
    return loss / B


def _reference(binary, y11, y12, y21, y22, target, w):
    # Pure-JAX reference mirroring the PyTorch module.
    def ce(logits, labels):
        logp = jax.nn.log_softmax(logits, axis=-1)
        return -jnp.take_along_axis(logp, labels[:, None], axis=-1)[:, 0]

    B = target.shape[0]
    labels = target.astype(jnp.int32)
    loss = jnp.mean(ce(binary, labels[:, 0])) * w[0]
    pos = target[:, 0] >= 0.5
    neg = target[:, 0] <= 0.5
    n_pos = jnp.sum(pos.astype(jnp.float32))
    n_neg = jnp.sum(neg.astype(jnp.float32))
    pos_f = pos.astype(jnp.float32)
    neg_f = neg.astype(jnp.float32)
    pos_term = (w[1] * jnp.sum(pos_f * ce(y21, labels[:, 3])) +
                w[2] * jnp.sum(pos_f * ce(y22, labels[:, 4])))
    neg_term = (w[1] * jnp.sum(neg_f * ce(y11, labels[:, 1])) +
                w[2] * jnp.sum(neg_f * ce(y12, labels[:, 2])))
    loss = loss + jnp.where(n_pos > 0, pos_term / jnp.maximum(n_pos, 1.0), 0.0)
    loss = loss + jnp.where(n_neg > 0, neg_term / jnp.maximum(n_neg, 1.0), 0.0)
    return loss / B


if __name__ == "__main__":
    NUM_CLASSES = 6
    loss_weights = jnp.asarray([1.0, 0.5, 0.25], dtype=jnp.float32)

    def make_inputs(key, B):
        k0, k1, k2, k3, k4, k5, k6 = jax.random.split(key, 7)
        binary = jax.random.normal(k0, (B, 2), dtype=jnp.float32)
        y_1_1 = jax.random.normal(k1, (B, NUM_CLASSES), dtype=jnp.float32)
        y_1_2 = jax.random.normal(k2, (B, NUM_CLASSES), dtype=jnp.float32)
        y_2_1 = jax.random.normal(k3, (B, NUM_CLASSES), dtype=jnp.float32)
        y_2_2 = jax.random.normal(k4, (B, NUM_CLASSES), dtype=jnp.float32)
        t_bin = jax.random.bernoulli(k5, 0.5, (B,)).astype(jnp.float32)
        t_cls = jax.random.randint(k6, (B, 4), 0, NUM_CLASSES).astype(jnp.float32)
        target = jnp.concatenate([t_bin[:, None], t_cls], axis=1)   # [B, 5] f32
        return binary, y_1_1, y_1_2, y_2_1, y_2_2, target

    key = jax.random.PRNGKey(0)
    k_a, k_b = jax.random.split(key)

    # 1) Small batch (module-scale test): single 128-lane tile with padding mask.
    args = make_inputs(k_a, 8)
    loss = jax.block_until_ready(weighted_cross_entropy(*args, loss_weights))
    ref = _reference(*args, loss_weights)
    assert jnp.allclose(loss, ref, rtol=1e-4, atol=1e-6), (loss, ref)

    # 2) Multi-tile grid path: B=520 with 256-lane tiles -> 3 grid steps + padding.
    args = make_inputs(k_b, 520)
    loss = jax.block_until_ready(
        weighted_cross_entropy(*args, loss_weights, max_tile_b=256))
    ref = _reference(*args, loss_weights)
    assert jnp.allclose(loss, ref, rtol=1e-4, atol=1e-6), (loss, ref)

    print("KERNEL_OK")
</pallas_src>

<mosaic_0001>
module attributes {stable_mosaic.version = 11 : i64} {
  func.func @_wce_kernel(%arg0: i32, %arg1: memref<2x128xf32, #tpu.memory_space<vmem>>, %arg2: memref<4x6x128xf32, #tpu.memory_space<vmem>>, %arg3: memref<5x128xf32, #tpu.memory_space<vmem>>, %arg4: memref<8x128xf32, #tpu.memory_space<vmem>>) attributes {dimension_semantics = [#tpu.dimension_semantics<parallel>], iteration_bounds = array<i64: 1>, scalar_prefetch = 0 : i64, scratch_operands = 0 : i64, tpu.core_type = #tpu.core_type<tc>, window_params = [{transform_indices = @transform_0, window_bounds = array<i64: 2, 128>}, {transform_indices = @transform_1, window_bounds = array<i64: 4, 6, 128>}, {transform_indices = @transform_2, window_bounds = array<i64: 5, 128>}, {transform_indices = @transform_3, window_bounds = array<i64: 8, 128>}]} {
    %c0 = arith.constant 0 : index
    %c0_0 = arith.constant 0 : index
    %0 = vector.load %arg3[%c0, %c0_0] : memref<5x128xf32, #tpu.memory_space<vmem>>, vector<1x128xf32>
    %1 = arith.fptosi %0 : vector<1x128xf32> to vector<1x128xi32>
    %c1 = arith.constant 1 : index
    %c0_1 = arith.constant 0 : index
    %2 = vector.load %arg3[%c1, %c0_1] : memref<5x128xf32, #tpu.memory_space<vmem>>, vector<1x128xf32>
    %3 = arith.fptosi %2 : vector<1x128xf32> to vector<1x128xi32>
    %c2 = arith.constant 2 : index
    %c0_2 = arith.constant 0 : index
    %4 = vector.load %arg3[%c2, %c0_2] : memref<5x128xf32, #tpu.memory_space<vmem>>, vector<1x128xf32>
    %5 = arith.fptosi %4 : vector<1x128xf32> to vector<1x128xi32>
    %c3 = arith.constant 3 : index
    %c0_3 = arith.constant 0 : index
    %6 = vector.load %arg3[%c3, %c0_3] : memref<5x128xf32, #tpu.memory_space<vmem>>, vector<1x128xf32>
    %7 = arith.fptosi %6 : vector<1x128xf32> to vector<1x128xi32>
    %c4 = arith.constant 4 : index
    %c0_4 = arith.constant 0 : index
    %8 = vector.load %arg3[%c4, %c0_4] : memref<5x128xf32, #tpu.memory_space<vmem>>, vector<1x128xf32>
    %9 = arith.fptosi %8 : vector<1x128xf32> to vector<1x128xi32>
    %c0_5 = arith.constant 0 : index
    %c0_6 = arith.constant 0 : index
    %10 = vector.load %arg1[%c0_5, %c0_6] : memref<2x128xf32, #tpu.memory_space<vmem>>, vector<2x128xf32>
    %cst = arith.constant dense<0xFF800000> : vector<128xf32>
    %11 = vector.multi_reduction <maximumf>, %10, %cst [0] : vector<2x128xf32> to vector<128xf32>
    %12 = vector.shape_cast %11 : vector<128xf32> to vector<1x128xf32>
    %13 = vector.broadcast %12 : vector<1x128xf32> to vector<2x128xf32>
    %14 = arith.subf %10, %13 : vector<2x128xf32>
    %15 = math.exp %14 : vector<2x128xf32>
    %cst_7 = arith.constant dense<0.000000e+00> : vector<128xf32>
    %16 = vector.multi_reduction <add>, %15, %cst_7 [0] : vector<2x128xf32> to vector<128xf32>
    %17 = vector.shape_cast %16 : vector<128xf32> to vector<1x128xf32>
    %18 = tpu.iota {dimensions = array<i32: 0>} : vector<2x128xi32>
    %19 = vector.broadcast %1 : vector<1x128xi32> to vector<2x128xi32>
    %20 = arith.cmpi eq, %18, %19 : vector<2x128xi32>
    %cst_8 = arith.constant 0.000000e+00 : f32
    %21 = vector.broadcast %cst_8 : f32 to vector<2x128xf32>
    %22 = arith.select %20, %14, %21 : vector<2x128xi1>, vector<2x128xf32>
    %cst_9 = arith.constant dense<0.000000e+00> : vector<128xf32>
    %23 = vector.multi_reduction <add>, %22, %cst_9 [0] : vector<2x128xf32> to vector<128xf32>
    %24 = vector.shape_cast %23 : vector<128xf32> to vector<1x128xf32>
    %25 = math.log %17 : vector<1x128xf32>
    %26 = arith.subf %25, %24 : vector<1x128xf32>
    %c0_10 = arith.constant 0 : index
    %c0_11 = arith.constant 0 : index
    %c0_12 = arith.constant 0 : index
    %27 = vector.load %arg2[%c0_10, %c0_11, %c0_12] : memref<4x6x128xf32, #tpu.memory_space<vmem>>, vector<1x6x128xf32>
    %28 = vector.shape_cast %27 : vector<1x6x128xf32> to vector<6x128xf32>
    %cst_13 = arith.constant dense<0xFF800000> : vector<128xf32>
    %29 = vector.multi_reduction <maximumf>, %28, %cst_13 [0] : vector<6x128xf32> to vector<128xf32>
    %30 = vector.shape_cast %29 : vector<128xf32> to vector<1x128xf32>
    %31 = vector.broadcast %30 : vector<1x128xf32> to vector<6x128xf32>
    %32 = arith.subf %28, %31 : vector<6x128xf32>
    %33 = math.exp %32 : vector<6x128xf32>
    %cst_14 = arith.constant dense<0.000000e+00> : vector<128xf32>
    %34 = vector.multi_reduction <add>, %33, %cst_14 [0] : vector<6x128xf32> to vector<128xf32>
    %35 = vector.shape_cast %34 : vector<128xf32> to vector<1x128xf32>
    %36 = tpu.iota {dimensions = array<i32: 0>} : vector<6x128xi32>
    %37 = vector.broadcast %3 : vector<1x128xi32> to vector<6x128xi32>
    %38 = arith.cmpi eq, %36, %37 : vector<6x128xi32>
    %cst_15 = arith.constant 0.000000e+00 : f32
    %39 = vector.broadcast %cst_15 : f32 to vector<6x128xf32>
    %40 = arith.select %38, %32, %39 : vector<6x128xi1>, vector<6x128xf32>
    %cst_16 = arith.constant dense<0.000000e+00> : vector<128xf32>
    %41 = vector.multi_reduction <add>, %40, %cst_16 [0] : vector<6x128xf32> to vector<128xf32>
    %42 = vector.shape_cast %41 : vector<128xf32> to vector<1x128xf32>
    %43 = math.log %35 : vector<1x128xf32>
    %44 = arith.subf %43, %42 : vector<1x128xf32>
    %c1_17 = arith.constant 1 : index
    %c0_18 = arith.constant 0 : index
    %c0_19 = arith.constant 0 : index
    %45 = vector.load %arg2[%c1_17, %c0_18, %c0_19] : memref<4x6x128xf32, #tpu.memory_space<vmem>>, vector<1x6x128xf32>
    %46 = vector.shape_cast %45 : vector<1x6x128xf32> to vector<6x128xf32>
    %cst_20 = arith.constant dense<0xFF800000> : vector<128xf32>
    %47 = vector.multi_reduction <maximumf>, %46, %cst_20 [0] : vector<6x128xf32> to vector<128xf32>
    %48 = vector.shape_cast %47 : vector<128xf32> to vector<1x128xf32>
    %49 = vector.broadcast %48 : vector<1x128xf32> to vector<6x128xf32>
    %50 = arith.subf %46, %49 : vector<6x128xf32>
    %51 = math.exp %50 : vector<6x128xf32>
    %cst_21 = arith.constant dense<0.000000e+00> : vector<128xf32>
    %52 = vector.multi_reduction <add>, %51, %cst_21 [0] : vector<6x128xf32> to vector<128xf32>
    %53 = vector.shape_cast %52 : vector<128xf32> to vector<1x128xf32>
    %54 = tpu.iota {dimensions = array<i32: 0>} : vector<6x128xi32>
    %55 = vector.broadcast %5 : vector<1x128xi32> to vector<6x128xi32>
    %56 = arith.cmpi eq, %54, %55 : vector<6x128xi32>
    %cst_22 = arith.constant 0.000000e+00 : f32
    %57 = vector.broadcast %cst_22 : f32 to vector<6x128xf32>
    %58 = arith.select %56, %50, %57 : vector<6x128xi1>, vector<6x128xf32>
    %cst_23 = arith.constant dense<0.000000e+00> : vector<128xf32>
    %59 = vector.multi_reduction <add>, %58, %cst_23 [0] : vector<6x128xf32> to vector<128xf32>
    %60 = vector.shape_cast %59 : vector<128xf32> to vector<1x128xf32>
    %61 = math.log %53 : vector<1x128xf32>
    %62 = arith.subf %61, %60 : vector<1x128xf32>
    %c2_24 = arith.constant 2 : index
    %c0_25 = arith.constant 0 : index
    %c0_26 = arith.constant 0 : index
    %63 = vector.load %arg2[%c2_24, %c0_25, %c0_26] : memref<4x6x128xf32, #tpu.memory_space<vmem>>, vector<1x6x128xf32>
    %64 = vector.shape_cast %63 : vector<1x6x128xf32> to vector<6x128xf32>
    %cst_27 = arith.constant dense<0xFF800000> : vector<128xf32>
    %65 = vector.multi_reduction <maximumf>, %64, %cst_27 [0] : vector<6x128xf32> to vector<128xf32>
    %66 = vector.shape_cast %65 : vector<128xf32> to vector<1x128xf32>
    %67 = vector.broadcast %66 : vector<1x128xf32> to vector<6x128xf32>
    %68 = arith.subf %64, %67 : vector<6x128xf32>
    %69 = math.exp %68 : vector<6x128xf32>
    %cst_28 = arith.constant dense<0.000000e+00> : vector<128xf32>
    %70 = vector.multi_reduction <add>, %69, %cst_28 [0] : vector<6x128xf32> to vector<128xf32>
    %71 = vector.shape_cast %70 : vector<128xf32> to vector<1x128xf32>
    %72 = tpu.iota {dimensions = array<i32: 0>} : vector<6x128xi32>
    %73 = vector.broadcast %7 : vector<1x128xi32> to vector<6x128xi32>
    %74 = arith.cmpi eq, %72, %73 : vector<6x128xi32>
    %cst_29 = arith.constant 0.000000e+00 : f32
    %75 = vector.broadcast %cst_29 : f32 to vector<6x128xf32>
    %76 = arith.select %74, %68, %75 : vector<6x128xi1>, vector<6x128xf32>
    %cst_30 = arith.constant dense<0.000000e+00> : vector<128xf32>
    %77 = vector.multi_reduction <add>, %76, %cst_30 [0] : vector<6x128xf32> to vector<128xf32>
    %78 = vector.shape_cast %77 : vector<128xf32> to vector<1x128xf32>
    %79 = math.log %71 : vector<1x128xf32>
    %80 = arith.subf %79, %78 : vector<1x128xf32>
    %c3_31 = arith.constant 3 : index
    %c0_32 = arith.constant 0 : index
    %c0_33 = arith.constant 0 : index
    %81 = vector.load %arg2[%c3_31, %c0_32, %c0_33] : memref<4x6x128xf32, #tpu.memory_space<vmem>>, vector<1x6x128xf32>
    %82 = vector.shape_cast %81 : vector<1x6x128xf32> to vector<6x128xf32>
    %cst_34 = arith.constant dense<0xFF800000> : vector<128xf32>
    %83 = vector.multi_reduction <maximumf>, %82, %cst_34 [0] : vector<6x128xf32> to vector<128xf32>
    %84 = vector.shape_cast %83 : vector<128xf32> to vector<1x128xf32>
    %85 = vector.broadcast %84 : vector<1x128xf32> to vector<6x128xf32>
    %86 = arith.subf %82, %85 : vector<6x128xf32>
    %87 = math.exp %86 : vector<6x128xf32>
    %cst_35 = arith.constant dense<0.000000e+00> : vector<128xf32>
    %88 = vector.multi_reduction <add>, %87, %cst_35 [0] : vector<6x128xf32> to vector<128xf32>
    %89 = vector.shape_cast %88 : vector<128xf32> to vector<1x128xf32>
    %90 = tpu.iota {dimensions = array<i32: 0>} : vector<6x128xi32>
    %91 = vector.broadcast %9 : vector<1x128xi32> to vector<6x128xi32>
    %92 = arith.cmpi eq, %90, %91 : vector<6x128xi32>
    %cst_36 = arith.constant 0.000000e+00 : f32
    %93 = vector.broadcast %cst_36 : f32 to vector<6x128xf32>
    %94 = arith.select %92, %86, %93 : vector<6x128xi1>, vector<6x128xf32>
    %cst_37 = arith.constant dense<0.000000e+00> : vector<128xf32>
    %95 = vector.multi_reduction <add>, %94, %cst_37 [0] : vector<6x128xf32> to vector<128xf32>
    %96 = vector.shape_cast %95 : vector<128xf32> to vector<1x128xf32>
    %97 = math.log %89 : vector<1x128xf32>
    %98 = arith.subf %97, %96 : vector<1x128xf32>
    %c128_i32 = arith.constant 128 : i32
    %99 = arith.muli %arg0, %c128_i32 : i32
    %100 = tpu.iota {dimensions = array<i32: 1>} : vector<1x128xi32>
    %101 = vector.broadcast %99 : i32 to vector<1x128xi32>
    %102 = arith.addi %101, %100 : vector<1x128xi32>
    %c8_i32 = arith.constant 8 : i32
    %103 = vector.broadcast %c8_i32 : i32 to vector<1x128xi32>
    %104 = arith.cmpi slt, %102, %103 : vector<1x128xi32>
    %105 = arith.extui %104 : vector<1x128xi1> to vector<1x128xi32>
    %106 = arith.sitofp %105 : vector<1x128xi32> to vector<1x128xf32>
    %cst_38 = arith.constant 5.000000e-01 : f32
    %107 = vector.broadcast %cst_38 : f32 to vector<1x128xf32>
    %108 = arith.cmpf oge, %0, %107 : vector<1x128xf32>
    %cst_39 = arith.constant 0.000000e+00 : f32
    %109 = vector.broadcast %cst_39 : f32 to vector<1x128xf32>
    %110 = arith.select %108, %106, %109 : vector<1x128xi1>, vector<1x128xf32>
    %cst_40 = arith.constant 5.000000e-01 : f32
    %111 = vector.broadcast %cst_40 : f32 to vector<1x128xf32>
    %112 = arith.cmpf ole, %0, %111 : vector<1x128xf32>
    %cst_41 = arith.constant 0.000000e+00 : f32
    %113 = vector.broadcast %cst_41 : f32 to vector<1x128xf32>
    %114 = arith.select %112, %106, %113 : vector<1x128xi1>, vector<1x128xf32>
    %115 = arith.mulf %106, %26 : vector<1x128xf32>
    %116 = vector.shape_cast %115 : vector<1x128xf32> to vector<1x1x128xf32>
    %cst_42 = arith.constant dense<0.000000e+00> : vector<1xf32>
    %117 = vector.multi_reduction <add>, %116, %cst_42 [1, 2] : vector<1x1x128xf32> to vector<1xf32>
    %118 = vector.shape_cast %117 : vector<1xf32> to vector<1x1x1xf32>
    %119 = vector.extract %118[0, 0, 0] : f32 from vector<1x1x1xf32>
    %120 = arith.mulf %114, %44 : vector<1x128xf32>
    %121 = vector.shape_cast %120 : vector<1x128xf32> to vector<1x1x128xf32>
    %cst_43 = arith.constant dense<0.000000e+00> : vector<1xf32>
    %122 = vector.multi_reduction <add>, %121, %cst_43 [1, 2] : vector<1x1x128xf32> to vector<1xf32>
    %123 = vector.shape_cast %122 : vector<1xf32> to vector<1x1x1xf32>
    %124 = vector.extract %123[0, 0, 0] : f32 from vector<1x1x1xf32>
    %125 = arith.mulf %114, %62 : vector<1x128xf32>
    %126 = vector.shape_cast %125 : vector<1x128xf32> to vector<1x1x128xf32>
    %cst_44 = arith.constant dense<0.000000e+00> : vector<1xf32>
    %127 = vector.multi_reduction <add>, %126, %cst_44 [1, 2] : vector<1x1x128xf32> to vector<1xf32>
    %128 = vector.shape_cast %127 : vector<1xf32> to vector<1x1x1xf32>
    %129 = vector.extract %128[0, 0, 0] : f32 from vector<1x1x1xf32>
    %130 = arith.mulf %110, %80 : vector<1x128xf32>
    %131 = vector.shape_cast %130 : vector<1x128xf32> to vector<1x1x128xf32>
    %cst_45 = arith.constant dense<0.000000e+00> : vector<1xf32>
    %132 = vector.multi_reduction <add>, %131, %cst_45 [1, 2] : vector<1x1x128xf32> to vector<1xf32>
    %133 = vector.shape_cast %132 : vector<1xf32> to vector<1x1x1xf32>
    %134 = vector.extract %133[0, 0, 0] : f32 from vector<1x1x1xf32>
    %135 = arith.mulf %110, %98 : vector<1x128xf32>
    %136 = vector.shape_cast %135 : vector<1x128xf32> to vector<1x1x128xf32>
    %cst_46 = arith.constant dense<0.000000e+00> : vector<1xf32>
    %137 = vector.multi_reduction <add>, %136, %cst_46 [1, 2] : vector<1x1x128xf32> to vector<1xf32>
    %138 = vector.shape_cast %137 : vector<1xf32> to vector<1x1x1xf32>
    %139 = vector.extract %138[0, 0, 0] : f32 from vector<1x1x1xf32>
    %140 = vector.shape_cast %110 : vector<1x128xf32> to vector<1x1x128xf32>
    %cst_47 = arith.constant dense<0.000000e+00> : vector<1xf32>
    %141 = vector.multi_reduction <add>, %140, %cst_47 [1, 2] : vector<1x1x128xf32> to vector<1xf32>
    %142 = vector.shape_cast %141 : vector<1xf32> to vector<1x1x1xf32>
    %143 = vector.extract %142[0, 0, 0] : f32 from vector<1x1x1xf32>
    %144 = vector.shape_cast %114 : vector<1x128xf32> to vector<1x1x128xf32>
    %cst_48 = arith.constant dense<0.000000e+00> : vector<1xf32>
    %145 = vector.multi_reduction <add>, %144, %cst_48 [1, 2] : vector<1x1x128xf32> to vector<1xf32>
    %146 = vector.shape_cast %145 : vector<1xf32> to vector<1x1x1xf32>
    %147 = vector.extract %146[0, 0, 0] : f32 from vector<1x1x1xf32>
    %148 = tpu.iota {dimensions = array<i32: 0>} : vector<8x128xi32>
    %149 = tpu.iota {dimensions = array<i32: 1>} : vector<8x128xi32>
    %c128_i32_49 = arith.constant 128 : i32
    %150 = vector.broadcast %c128_i32_49 : i32 to vector<8x128xi32>
    %151 = arith.muli %148, %150 : vector<8x128xi32>
    %152 = arith.addi %151, %149 : vector<8x128xi32>
    %c0_i32 = arith.constant 0 : i32
    %153 = vector.broadcast %c0_i32 : i32 to vector<8x128xi32>
    %154 = arith.cmpi eq, %152, %153 : vector<8x128xi32>
    %cst_50 = arith.constant 0.000000e+00 : f32
    %155 = vector.broadcast %119 : f32 to vector<8x128xf32>
    %156 = vector.broadcast %cst_50 : f32 to vector<8x128xf32>
    %157 = arith.select %154, %155, %156 : vector<8x128xi1>, vector<8x128xf32>
    %c1_i32 = arith.constant 1 : i32
    %158 = vector.broadcast %c1_i32 : i32 to vector<8x128xi32>
    %159 = arith.cmpi eq, %152, %158 : vector<8x128xi32>
    %cst_51 = arith.constant 0.000000e+00 : f32
    %160 = vector.broadcast %124 : f32 to vector<8x128xf32>
    %161 = vector.broadcast %cst_51 : f32 to vector<8x128xf32>
    %162 = arith.select %159, %160, %161 : vector<8x128xi1>, vector<8x128xf32>
    %163 = arith.addf %157, %162 : vector<8x128xf32>
    %c2_i32 = arith.constant 2 : i32
    %164 = vector.broadcast %c2_i32 : i32 to vector<8x128xi32>
    %165 = arith.cmpi eq, %152, %164 : vector<8x128xi32>
    %cst_52 = arith.constant 0.000000e+00 : f32
    %166 = vector.broadcast %129 : f32 to vector<8x128xf32>
    %167 = vector.broadcast %cst_52 : f32 to vector<8x128xf32>
    %168 = arith.select %165, %166, %167 : vector<8x128xi1>, vector<8x128xf32>
    %169 = arith.addf %163, %168 : vector<8x128xf32>
    %c3_i32 = arith.constant 3 : i32
    %170 = vector.broadcast %c3_i32 : i32 to vector<8x128xi32>
    %171 = arith.cmpi eq, %152, %170 : vector<8x128xi32>
    %cst_53 = arith.constant 0.000000e+00 : f32
    %172 = vector.broadcast %134 : f32 to vector<8x128xf32>
    %173 = vector.broadcast %cst_53 : f32 to vector<8x128xf32>
    %174 = arith.select %171, %172, %173 : vector<8x128xi1>, vector<8x128xf32>
    %175 = arith.addf %169, %174 : vector<8x128xf32>
    %c4_i32 = arith.constant 4 : i32
    %176 = vector.broadcast %c4_i32 : i32 to vector<8x128xi32>
    %177 = arith.cmpi eq, %152, %176 : vector<8x128xi32>
    %cst_54 = arith.constant 0.000000e+00 : f32
    %178 = vector.broadcast %139 : f32 to vector<8x128xf32>
    %179 = vector.broadcast %cst_54 : f32 to vector<8x128xf32>
    %180 = arith.select %177, %178, %179 : vector<8x128xi1>, vector<8x128xf32>
    %181 = arith.addf %175, %180 : vector<8x128xf32>
    %c5_i32 = arith.constant 5 : i32
    %182 = vector.broadcast %c5_i32 : i32 to vector<8x128xi32>
    %183 = arith.cmpi eq, %152, %182 : vector<8x128xi32>
    %cst_55 = arith.constant 0.000000e+00 : f32
    %184 = vector.broadcast %143 : f32 to vector<8x128xf32>
    %185 = vector.broadcast %cst_55 : f32 to vector<8x128xf32>
    %186 = arith.select %183, %184, %185 : vector<8x128xi1>, vector<8x128xf32>
    %187 = arith.addf %181, %186 : vector<8x128xf32>
    %c6_i32 = arith.constant 6 : i32
    %188 = vector.broadcast %c6_i32 : i32 to vector<8x128xi32>
    %189 = arith.cmpi eq, %152, %188 : vector<8x128xi32>
    %cst_56 = arith.constant 0.000000e+00 : f32
    %190 = vector.broadcast %147 : f32 to vector<8x128xf32>
    %191 = vector.broadcast %cst_56 : f32 to vector<8x128xf32>
    %192 = arith.select %189, %190, %191 : vector<8x128xi1>, vector<8x128xf32>
    %193 = arith.addf %187, %192 : vector<8x128xf32>
    %c0_57 = arith.constant 0 : index
    %c0_58 = arith.constant 0 : index
    %194 = vector.load %arg4[%c0_57, %c0_58] : memref<8x128xf32, #tpu.memory_space<vmem>>, vector<8x128xf32>
    tpu.vector_store %arg4[%c0_57, %c0_58], %193 {strides = array<i32>} : memref<8x128xf32, #tpu.memory_space<vmem>>, vector<8x128xf32>,
    return
  }
  func.func @transform_0(%arg0: i32) -> (i32, i32) {
    %c0_i32 = arith.constant 0 : i32
    %c0_i32_0 = arith.constant 0 : i32
    return %c0_i32, %arg0 : i32, i32
  }
  func.func @transform_1(%arg0: i32) -> (i32, i32, i32) {
    %c0_i32 = arith.constant 0 : i32
    %c0_i32_0 = arith.constant 0 : i32
    %c0_i32_1 = arith.constant 0 : i32
    return %c0_i32, %c0_i32_0, %arg0 : i32, i32, i32
  }
  func.func @transform_2(%arg0: i32) -> (i32, i32) {
    %c0_i32 = arith.constant 0 : i32
    %c0_i32_0 = arith.constant 0 : i32
    return %c0_i32, %arg0 : i32, i32
  }
  func.func @transform_3(%arg0: i32) -> (i32, i32) {
    %c0_i32 = arith.constant 0 : i32
    %c0_i32_0 = arith.constant 0 : i32
    return %arg0, %c0_i32 : i32, i32
  }
}

</mosaic_0001>

<llo_original>
// kernel: weighted_cross_entropy.1
$region0: #{weighted_cross_entropy.1}
  #allocation0 [shape = 'u32[]', space=smem, size = 0x4, offset = 0x4, fixed_abs, tag = 'smem constant byte address 0x4 - core index']
  #allocation1 [shape = 'u32[72,128]{1,0:T(1,128)}', space=vmem, size = 0x9000, scoped, tag = 'internal scratch']
  %s0 = inlined_call_operand.vmem [shape: f32[2,128], index: 0, kind: input, shape index: {}]
  %s1 = inlined_call_operand.vmem [shape: f32[4,6,128], index: 1, kind: input, shape index: {}]
  %s2 = inlined_call_operand.vmem [shape: f32[5,128], index: 2, kind: input, shape index: {}]
  %s3 = inlined_call_operand.vmem [shape: f32[8,128], index: 3, kind: output, shape index: {}]
  %s4 = sld [smem:[#allocation0]]
  $region22: #{weighted_cross_entropy.1} parent=0
    _
  %s6 = ssub.s32 1, %s4
  %s7 = scalar_select 0, %s6, %s4
  // Predicated region
  $region2: #{weighted_cross_entropy.1} parent=0 // pred_check
    _
  $region3: #{weighted_cross_entropy.1} parent=0 // pred_check_branch
    %9 = sbr.rel (0) target = $region5
  $region4: #{weighted_cross_entropy.1} parent=0 // pred_region
    _
  $region5: #{weighted_cross_entropy.1} parent=0 // pred_fallthru
    _
  // Predicated region
  $region6: #{weighted_cross_entropy.1} parent=0 // pred_check
    _
  $region7: #{weighted_cross_entropy.1} parent=0 // pred_check_branch
    %11 = sbr.rel (0) target = $region9
  $region8: #{weighted_cross_entropy.1} parent=0 // pred_region
    _
  $region9: #{weighted_cross_entropy.1} parent=0 // pred_fallthru
    _
  // Predicated region
  $region10: #{weighted_cross_entropy.1} parent=0 // pred_check
    _
  $region11: #{weighted_cross_entropy.1} parent=0 // pred_check_branch
    %13 = sbr.rel (0) target = $region13
  $region12: #{weighted_cross_entropy.1} parent=0 // pred_region
    _
  $region13: #{weighted_cross_entropy.1} parent=0 // pred_fallthru
    _
  %v14 = vld [vmem:[%s2] sm:$0x1]
  %v15 = vcvt.f32.s32.to.zero.pseudo %v14
  %v16 = vld [vmem:[%s2 + $0x1] sm:$0x1]
  %v17 = vcvt.f32.s32.to.zero.pseudo %v16
  %v18 = vld [vmem:[%s2 + $0x2] sm:$0x1]
  %v19 = vcvt.f32.s32.to.zero.pseudo %v18
  %v20 = vld [vmem:[%s2 + $0x3] sm:$0x1]
  %v21 = vcvt.f32.s32.to.zero.pseudo %v20
  %v22 = vld [vmem:[%s2 + $0x4] sm:$0x1]
  %v23 = vcvt.f32.s32.to.zero.pseudo %v22
  %v24 = vld [vmem:[%s0] sm:$0x3]
  %vm25 = vcmask 1041408
  %v26 = vsel %vm25, %v24, -inf
  %v27 = vrot.slane %v26, 4
  %v28 = vmax.f32 %v26, %v27
  %v29 = vrot.slane %v28, 2
  %v30 = vmax.f32 %v28, %v29
  %v31 = vrot.slane %v30, 1
  %v32 = vmax.f32 %v30, %v31
  %v33 = vsub.f32 %v24, %v32
  %v34 = vmul.f32 %v33, 1.442695
  %v35 = vpow.pop %v34
  %v36 = vsel %vm25, %v35, 0.0
  %v37 = vrot.slane %v36, 4
  %v38 = vadd.f32 %v36, %v37
  %v39 = vrot.slane %v38, 2
  %v40 = vadd.f32 %v38, %v39
  %v41 = vrot.slane %v40, 1
  %v42 = vadd.f32 %v40, %v41
  %v43 = vlaneseq
  %v44 = vshrl.u32 %v43, 7
  %v45 = vperm.slane %v15, 0
  %vm46 = vcmp.eq.s32.totalorder %v44, %v45
  %v47 = vsel %vm46, %v33, 0.0
  %v48 = vsel %vm25, %v47, 0.0
  %v49 = vrot.slane %v48, 4
  %v50 = vadd.f32 %v48, %v49
  %v51 = vrot.slane %v50, 2
  %v52 = vadd.f32 %v50, %v51
  %v53 = vrot.slane %v52, 1
  %v54 = vadd.f32 %v52, %v53
  %v55 = vlog2.pop %v42
  %v56 = vmul.f32 %v55, 0.6931472
  %v57 = vsub.f32 %v56, %v54
  %v58 = vld [vmem:[%s1] sm:$0x3f]
  %vm59 = vcmask 1045504
  %v60 = vsel %vm59, %v58, -inf
  %v61 = vrot.slane %v60, 4
  %v62 = vmax.f32 %v60, %v61
  %v63 = vrot.slane %v62, 2
  %v64 = vmax.f32 %v62, %v63
  %v65 = vrot.slane %v64, 1
  %v66 = vmax.f32 %v64, %v65
  %v67 = vsub.f32 %v58, %v66
  %v68 = vmul.f32 %v67, 1.442695
  %v69 = vpow.pop %v68
  %v70 = vsel %vm59, %v69, 0.0
  %v71 = vrot.slane %v70, 4
  %v72 = vadd.f32 %v70, %v71
  %v73 = vrot.slane %v72, 2
  %v74 = vadd.f32 %v72, %v73
  %v75 = vrot.slane %v74, 1
  %v76 = vadd.f32 %v74, %v75
  %v77 = vperm.slane %v17, 0
  %vm78 = vcmp.eq.s32.totalorder %v44, %v77
  %v79 = vsel %vm78, %v67, 0.0
  %v80 = vsel %vm59, %v79, 0.0
  %v81 = vrot.slane %v80, 4
  %v82 = vadd.f32 %v80, %v81
  %v83 = vrot.slane %v82, 2
  %v84 = vadd.f32 %v82, %v83
  %v85 = vrot.slane %v84, 1
  %v86 = vadd.f32 %v84, %v85
  %v87 = vlog2.pop %v76
  %v88 = vmul.f32 %v87, 0.6931472
  %v89 = vsub.f32 %v88, %v86
  %s90 = scalar_lea.vmem %s1, 8
  %v91 = vld [vmem:[%s90] sm:$0x3f]
  %v92 = vsel %vm59, %v91, -inf
  %v93 = vrot.slane %v92, 4
  %v94 = vmax.f32 %v92, %v93
  %v95 = vrot.slane %v94, 2
  %v96 = vmax.f32 %v94, %v95
  %v97 = vrot.slane %v96, 1
  %v98 = vmax.f32 %v96, %v97
  %v99 = vsub.f32 %v91, %v98
  %v100 = vmul.f32 %v99, 1.442695
  %v101 = vpow.pop %v100
  %v102 = vsel %vm59, %v101, 0.0
  %v103 = vrot.slane %v102, 4
  %v104 = vadd.f32 %v102, %v103
  %v105 = vrot.slane %v104, 2
  %v106 = vadd.f32 %v104, %v105
  %v107 = vrot.slane %v106, 1
  %v108 = vadd.f32 %v106, %v107
  %v109 = vperm.slane %v19, 0
  %vm110 = vcmp.eq.s32.totalorder %v44, %v109
  %v111 = vsel %vm110, %v99, 0.0
  %v112 = vsel %vm59, %v111, 0.0
  %v113 = vrot.slane %v112, 4
  %v114 = vadd.f32 %v112, %v113
  %v115 = vrot.slane %v114, 2
  %v116 = vadd.f32 %v114, %v115
  %v117 = vrot.slane %v116, 1
  %v118 = vadd.f32 %v116, %v117
  %v119 = vlog2.pop %v108
  %v120 = vmul.f32 %v119, 0.6931472
  %v121 = vsub.f32 %v120, %v118
  %s122 = scalar_lea.vmem %s1, 16
  %v123 = vld [vmem:[%s122] sm:$0x3f]
  %v124 = vsel %vm59, %v123, -inf
  %v125 = vrot.slane %v124, 4
  %v126 = vmax.f32 %v124, %v125
  %v127 = vrot.slane %v126, 2
  %v128 = vmax.f32 %v126, %v127
  %v129 = vrot.slane %v128, 1
  %v130 = vmax.f32 %v128, %v129
  %v131 = vsub.f32 %v123, %v130
  %v132 = vmul.f32 %v131, 1.442695
  %v133 = vpow.pop %v132
  %v134 = vsel %vm59, %v133, 0.0
  %v135 = vrot.slane %v134, 4
  %v136 = vadd.f32 %v134, %v135
  %v137 = vrot.slane %v136, 2
  %v138 = vadd.f32 %v136, %v137
  %v139 = vrot.slane %v138, 1
  %v140 = vadd.f32 %v138, %v139
  %v141 = vperm.slane %v21, 0
  %vm142 = vcmp.eq.s32.totalorder %v44, %v141
  %v143 = vsel %vm142, %v131, 0.0
  %v144 = vsel %vm59, %v143, 0.0
  %v145 = vrot.slane %v144, 4
  %v146 = vadd.f32 %v144, %v145
  %v147 = vrot.slane %v146, 2
  %v148 = vadd.f32 %v146, %v147
  %v149 = vrot.slane %v148, 1
  %v150 = vadd.f32 %v148, %v149
  %v151 = vlog2.pop %v140
  %v152 = vmul.f32 %v151, 0.6931472
  %v153 = vsub.f32 %v152, %v150
  %s154 = scalar_lea.vmem %s1, 24
  %v155 = vld [vmem:[%s154] sm:$0x3f]
  %v156 = vsel %vm59, %v155, -inf
  %v157 = vrot.slane %v156, 4
  %v158 = vmax.f32 %v156, %v157
  %v159 = vrot.slane %v158, 2
  %v160 = vmax.f32 %v158, %v159
  %v161 = vrot.slane %v160, 1
  %v162 = vmax.f32 %v160, %v161
  %v163 = vsub.f32 %v155, %v162
  %v164 = vmul.f32 %v163, 1.442695
  %v165 = vpow.pop %v164
  %v166 = vsel %vm59, %v165, 0.0
  %v167 = vrot.slane %v166, 4
  %v168 = vadd.f32 %v166, %v167
  %v169 = vrot.slane %v168, 2
  %v170 = vadd.f32 %v168, %v169
  %v171 = vrot.slane %v170, 1
  %v172 = vadd.f32 %v170, %v171
  %v173 = vperm.slane %v23, 0
  %vm174 = vcmp.eq.s32.totalorder %v44, %v173
  %v175 = vsel %vm174, %v163, 0.0
  %v176 = vsel %vm59, %v175, 0.0
  %v177 = vrot.slane %v176, 4
  %v178 = vadd.f32 %v176, %v177
  %v179 = vrot.slane %v178, 2
  %v180 = vadd.f32 %v178, %v179
  %v181 = vrot.slane %v180, 1
  %v182 = vadd.f32 %v180, %v181
  %v183 = vlog2.pop %v172
  %v184 = vmul.f32 %v183, 0.6931472
  %v185 = vsub.f32 %v184, %v182
  %s186 = smul.u32 0, 128
  %v187 = vlaneseq
  %v188 = vand.u32 %v187, 127
  %v189 = vstv %s186
  %v190 = vadd.s32 %v189, %v188
  %vm191 = vcmp.lt.s32.totalorder %v190, 8
  %v192 = vsel %vm191, 1, 0
  %v193 = vcvt.s32.f32 %v192
  %vm194 = vcmp.ge.f32.partialorder %v14, 0.5
  %v195 = vsel %vm194, %v193, 0.0
  %vm196 = vcmp.le.f32.partialorder %v14, 0.5
  %v197 = vsel %vm196, %v193, 0.0
  %v198 = vmul.f32 %v193, %v57
  %vm199 = vcmask 1040384
  %v200 = vsel %vm199, %v198, 0.0
  %201 = vadd.xlane.f32.xlu0 %v200
  %v202 = vpop.xlane.xlu0 %201
  %v203 = vrot.slane %v202, 4
  %v204 = vadd.f32 %v202, %v203
  %v205 = vrot.slane %v204, 2
  %v206 = vadd.f32 %v204, %v205
  %v207 = vrot.slane %v206, 1
  %v208 = vadd.f32 %v206, %v207
  %s209 = vtos %v208
  %v210 = vmul.f32 %v197, %v89
  %v211 = vsel %vm199, %v210, 0.0
  %212 = vadd.xlane.f32.xlu0 %v211
  %v213 = vpop.xlane.xlu0 %212
  %v214 = vrot.slane %v213, 4
  %v215 = vadd.f32 %v213, %v214
  %v216 = vrot.slane %v215, 2
  %v217 = vadd.f32 %v215, %v216
  %v218 = vrot.slane %v217, 1
  %v219 = vadd.f32 %v217, %v218
  %s220 = vtos %v219
  %v221 = vmul.f32 %v197, %v121
  %v222 = vsel %vm199, %v221, 0.0
  %223 = vadd.xlane.f32.xlu0 %v222
  %v224 = vpop.xlane.xlu0 %223
  %v225 = vrot.slane %v224, 4
  %v226 = vadd.f32 %v224, %v225
  %v227 = vrot.slane %v226, 2
  %v228 = vadd.f32 %v226, %v227
  %v229 = vrot.slane %v228, 1
  %v230 = vadd.f32 %v228, %v229
  %s231 = vtos %v230
  %v232 = vmul.f32 %v195, %v153
  %v233 = vsel %vm199, %v232, 0.0
  %234 = vadd.xlane.f32.xlu0 %v233
  %v235 = vpop.xlane.xlu0 %234
  %v236 = vrot.slane %v235, 4
  %v237 = vadd.f32 %v235, %v236
  %v238 = vrot.slane %v237, 2
  %v239 = vadd.f32 %v237, %v238
  %v240 = vrot.slane %v239, 1
  %v241 = vadd.f32 %v239, %v240
  %s242 = vtos %v241
  %v243 = vmul.f32 %v195, %v185
  %v244 = vsel %vm199, %v243, 0.0
  %245 = vadd.xlane.f32.xlu0 %v244
  %v246 = vpop.xlane.xlu0 %245
  %v247 = vrot.slane %v246, 4
  %v248 = vadd.f32 %v246, %v247
  %v249 = vrot.slane %v248, 2
  %v250 = vadd.f32 %v248, %v249
  %v251 = vrot.slane %v250, 1
  %v252 = vadd.f32 %v250, %v251
  %s253 = vtos %v252
  %v254 = vsel %vm199, %v195, 0.0
  %255 = vadd.xlane.f32.xlu0 %v254
  %v256 = vpop.xlane.xlu0 %255
  %v257 = vrot.slane %v256, 4
  %v258 = vadd.f32 %v256, %v257
  %v259 = vrot.slane %v258, 2
  %v260 = vadd.f32 %v258, %v259
  %v261 = vrot.slane %v260, 1
  %v262 = vadd.f32 %v260, %v261
  %s263 = vtos %v262
  %v264 = vsel %vm199, %v197, 0.0
  %265 = vadd.xlane.f32.xlu0 %v264
  %v266 = vpop.xlane.xlu0 %265
  %v267 = vrot.slane %v266, 4
  %v268 = vadd.f32 %v266, %v267
  %v269 = vrot.slane %v268, 2
  %v270 = vadd.f32 %v268, %v269
  %v271 = vrot.slane %v270, 1
  %v272 = vadd.f32 %v270, %v271
  %s273 = vtos %v272
  %v274 = vmul.u32 %v44, 128
  %v275 = vadd.s32 %v274, %v188
  %vm276 = vcmp.eq.s32.totalorder %v275, 0
  %v277 = vstv %s209
  %v278 = vsel %vm276, %v277, 0.0
  %vm279 = vcmp.eq.s32.totalorder %v275, 1
  %v280 = vstv %s220
  %v281 = vsel %vm279, %v280, 0.0
  %v282 = vadd.f32 %v278, %v281
  %vm283 = vcmp.eq.s32.totalorder %v275, 2
  %v284 = vstv %s231
  %v285 = vsel %vm283, %v284, 0.0
  %v286 = vadd.f32 %v282, %v285
  %vm287 = vcmp.eq.s32.totalorder %v275, 3
  %v288 = vstv %s242
  %v289 = vsel %vm287, %v288, 0.0
  %v290 = vadd.f32 %v286, %v289
  %vm291 = vcmp.eq.s32.totalorder %v275, 4
  %v292 = vstv %s253
  %v293 = vsel %vm291, %v292, 0.0
  %v294 = vadd.f32 %v290, %v293
  %vm295 = vcmp.eq.s32.totalorder %v275, 5
  %v296 = vstv %s263
  %v297 = vsel %vm295, %v296, 0.0
  %v298 = vadd.f32 %v294, %v297
  %vm299 = vcmp.eq.s32.totalorder %v275, 6
  %v300 = vstv %s273
  %v301 = vsel %vm299, %v300, 0.0
  %v302 = vadd.f32 %v298, %v301
  %303 = vst [vmem:[%s3] sm:$0xff] %v302
  // Predicated region
  $region14: #{weighted_cross_entropy.1} parent=0 // pred_check
    _
  $region15: #{weighted_cross_entropy.1} parent=0 // pred_check_branch
    %305 = sbr.rel (0) target = $region17
  $region16: #{weighted_cross_entropy.1} parent=0 // pred_region
    _
  $region17: #{weighted_cross_entropy.1} parent=0 // pred_fallthru
    _
  // Predicated region
  $region18: #{weighted_cross_entropy.1} parent=0 // pred_check
    _
  $region19: #{weighted_cross_entropy.1} parent=0 // pred_check_branch
    %307 = sbr.rel (0) target = $region21
  $region20: #{weighted_cross_entropy.1} parent=0 // pred_region
    _
  $region21: #{weighted_cross_entropy.1} parent=0 // pred_fallthru
    _

</llo_original>
